<compile_context>
chip_gen: v5e
topology: v5e:2x2
jax: 0.10.0
libtpu: 0.0.40
codegen_flags: <defaults>
</compile_context>

<pallas_src>
import functools

import jax
import jax.numpy as jnp
from jax.experimental import pallas as pl
from jax.experimental.pallas import tpu as pltpu

_LANE = 128
_SUBLANE = 8
_NEG_INF = -1e30


def _round_up(x: int, m: int) -> int:
    return ((x + m - 1) // m) * m


def _actor_critic_kernel(
    x_ref,
    w1_ref, b1_ref,
    w2_ref, b2_ref,
    wh_ref, bh_ref, mask_ref,
    head_ref, probs_ref,
):
    """Fused 2-layer MLP trunk + fused (policy|value) head + in-kernel softmax."""
    # MXU matmuls on bf16 operands, f32 accumulation; activations stay f32.
    x = x_ref[...].astype(jnp.bfloat16)

    h1 = jnp.tanh(
        jnp.dot(x, w1_ref[...], preferred_element_type=jnp.float32) + b1_ref[...]
    )
    h2 = jnp.tanh(
        jnp.dot(h1.astype(jnp.bfloat16), w2_ref[...],
                preferred_element_type=jnp.float32) + b2_ref[...]
    )

    # Fused head: columns [0, A) are logits, column A is the value, rest is padding.
    head = (
        jnp.dot(h2.astype(jnp.bfloat16), wh_ref[...],
                preferred_element_type=jnp.float32) + bh_ref[...]
    )
    head_ref[...] = head.astype(head_ref.dtype)

    # In-kernel softmax over the valid logit lanes (value + pad lanes masked out).
    masked = head + mask_ref[...]
    m = jnp.max(masked, axis=-1, keepdims=True)
    e = jnp.exp(masked - m)
    denom = jnp.sum(e, axis=-1, keepdims=True)
    probs_ref[...] = (e / denom).astype(probs_ref.dtype)


def init_params(key, input_size: int, latent_size: int, num_actions: int):
    """Raw (unpadded) f32 parameters, Glorot-uniform-ish init."""
    ks = jax.random.split(key, 4)

    def glorot(k, shape):
        fan_in, fan_out = shape
        lim = jnp.sqrt(6.0 / (fan_in + fan_out))
        return jax.random.uniform(k, shape, jnp.float32, -lim, lim)

    return {
        "w1": glorot(ks[0], (input_size, latent_size)),
        "b1": jnp.zeros((latent_size,), jnp.float32),
        "w2": glorot(ks[1], (latent_size, latent_size)),
        "b2": jnp.zeros((latent_size,), jnp.float32),
        "wpi": glorot(ks[2], (latent_size, num_actions)),
        "bpi": jnp.zeros((num_actions,), jnp.float32),
        "wv": glorot(ks[3], (latent_size, 1)),
        "bv": jnp.zeros((1,), jnp.float32),
    }


def prepare_params(params):
    """Pad latent to a 128 multiple, fuse policy+value heads into one lane-dense
    weight, cast matmul operands to bf16. Semantics-preserving (tanh(0)=0)."""
    w1, b1 = params["w1"], params["b1"]
    w2, b2 = params["w2"], params["b2"]
    wpi, bpi = params["wpi"], params["bpi"]
    wv, bv = params["wv"], params["bv"]

    input_size, latent = w1.shape
    num_actions = wpi.shape[1]
    lat_p = _round_up(latent, _LANE)
    head_p = _round_up(num_actions + 1, _LANE)

    w1p = jnp.zeros((input_size, lat_p), jnp.float32).at[:, :latent].set(w1)
    b1p = jnp.zeros((1, lat_p), jnp.float32).at[0, :latent].set(b1)
    w2p = jnp.zeros((lat_p, lat_p), jnp.float32).at[:latent, :latent].set(w2)
    b2p = jnp.zeros((1, lat_p), jnp.float32).at[0, :latent].set(b2)

    wh = jnp.concatenate([wpi, wv], axis=1)       # (latent, A+1)
    bh = jnp.concatenate([bpi, bv], axis=0)       # (A+1,)
    whp = jnp.zeros((lat_p, head_p), jnp.float32).at[:latent, :num_actions + 1].set(wh)
    bhp = jnp.zeros((1, head_p), jnp.float32).at[0, :num_actions + 1].set(bh)

    # Additive mask: 0 on valid logit lanes, -1e30 on the value lane and padding,
    # so the in-kernel softmax ignores everything but the real logits.
    logit_mask = (
        jnp.full((1, head_p), _NEG_INF, jnp.float32).at[0, :num_actions].set(0.0)
    )

    return {
        "w1": w1p.astype(jnp.bfloat16), "b1": b1p,
        "w2": w2p.astype(jnp.bfloat16), "b2": b2p,
        "wh": whp.astype(jnp.bfloat16), "bh": bhp,
        "mask": logit_mask,
    }


@functools.partial(jax.jit, static_argnames=("num_actions", "get_value"))
def base_model_forward(x, prepared, num_actions: int, state=(), get_value: bool = True):
    """Pallas-backed forward following the BaseModel convention.

    Returns (dist_params, next_state, extras): dist_params holds the discrete
    action logits/probs, next_state is the (empty) recurrent state, extras
    contains the critic value.
    """
    batch, input_size = x.shape
    head_p = prepared["wh"].shape[1]

    # Batch tile: one block for small batches, 512-row pipelined blocks otherwise.
    if batch <= 512:
        tb = _round_up(max(batch, 1), _SUBLANE)
    else:
        tb = 512
    padded_batch = _round_up(batch, tb)
    if padded_batch != batch:
        x = jnp.pad(x, ((0, padded_batch - batch), (0, 0)))
    grid = (padded_batch // tb,)

    in_specs = [
        pl.BlockSpec((tb, input_size), lambda i: (i, 0)),              # x: batch-tiled
        pl.BlockSpec(prepared["w1"].shape, lambda i: (0, 0)),          # weights: replicated
        pl.BlockSpec(prepared["b1"].shape, lambda i: (0, 0)),
        pl.BlockSpec(prepared["w2"].shape, lambda i: (0, 0)),
        pl.BlockSpec(prepared["b2"].shape, lambda i: (0, 0)),
        pl.BlockSpec(prepared["wh"].shape, lambda i: (0, 0)),
        pl.BlockSpec(prepared["bh"].shape, lambda i: (0, 0)),
        pl.BlockSpec(prepared["mask"].shape, lambda i: (0, 0)),
    ]
    out_specs = (
        pl.BlockSpec((tb, head_p), lambda i: (i, 0)),                  # logits|value slab
        pl.BlockSpec((tb, head_p), lambda i: (i, 0)),                  # probs slab
    )

    head, probs = pl.pallas_call(
        _actor_critic_kernel,
        out_shape=(
            jax.ShapeDtypeStruct((padded_batch, head_p), jnp.float32),
            jax.ShapeDtypeStruct((padded_batch, head_p), jnp.float32),
        ),
        grid=grid,
        in_specs=in_specs,
        out_specs=out_specs,
        compiler_params=pltpu.CompilerParams(
            dimension_semantics=("parallel",)),     # shards batch tiles across v7x's 2 TCs
    )(x, prepared["w1"], prepared["b1"], prepared["w2"], prepared["b2"],
      prepared["wh"], prepared["bh"], prepared["mask"])

    logits = head[:batch, :num_actions]
    value = head[:batch, num_actions]
    probs = probs[:batch, :num_actions]

    # TODO(synk): torch.distributions.Categorical object construction has no
    # Pallas/JAX equivalent here; we return the distribution parameters instead.
    dist = {"logits": logits, "probs": probs}
    extras = {"value": value} if get_value else {}
    return dist, state, extras


if __name__ == "__main__":
    # Small shapes consistent with the module: obs dim 32, latent 32, 4 actions.
    batch = 8
    input_size = 32
    latent_size = 32
    num_actions = 4

    key = jax.random.PRNGKey(0)
    k_x, k_p = jax.random.split(key)
    x = jax.random.normal(k_x, (batch, input_size), jnp.float32)
    raw = init_params(k_p, input_size, latent_size, num_actions)
    prepared = prepare_params(raw)

    dist, state, extras = base_model_forward(
        x, prepared, num_actions=num_actions, state=(), get_value=True)
    jax.block_until_ready(dist["logits"])
    jax.block_until_ready(dist["probs"])
    jax.block_until_ready(extras["value"])

    # Pure-JAX reference (f32); loose tolerance since kernel matmul operands are bf16.
    def ref_forward(xx, p):
        h1 = jnp.tanh(xx @ p["w1"] + p["b1"])
        h2 = jnp.tanh(h1 @ p["w2"] + p["b2"])
        logits = h2 @ p["wpi"] + p["bpi"]
        value = (h2 @ p["wv"] + p["bv"])[:, 0]
        return logits, jax.nn.softmax(logits, axis=-1), value

    ref_logits, ref_probs, ref_value = ref_forward(x, raw)
    assert jnp.allclose(dist["logits"], ref_logits, atol=5e-2, rtol=5e-2)
    assert jnp.allclose(dist["probs"], ref_probs, atol=5e-2, rtol=5e-2)
    assert jnp.allclose(extras["value"], ref_value, atol=5e-2, rtol=5e-2)

    assert dist["logits"].shape == (batch, num_actions)
    assert dist["probs"].shape == (batch, num_actions)
    assert extras["value"].shape == (batch,)
    assert state == ()

    print("KERNEL_OK")
</pallas_src>

<mosaic_0001>
module attributes {stable_mosaic.version = 11 : i64} {
  func.func @_actor_critic_kernel(%arg0: i32, %arg1: memref<8x32xf32, #tpu.memory_space<vmem>>, %arg2: memref<32x128xbf16, #tpu.memory_space<vmem>>, %arg3: memref<1x128xf32, #tpu.memory_space<vmem>>, %arg4: memref<128x128xbf16, #tpu.memory_space<vmem>>, %arg5: memref<1x128xf32, #tpu.memory_space<vmem>>, %arg6: memref<128x128xbf16, #tpu.memory_space<vmem>>, %arg7: memref<1x128xf32, #tpu.memory_space<vmem>>, %arg8: memref<1x128xf32, #tpu.memory_space<vmem>>, %arg9: memref<8x128xf32, #tpu.memory_space<vmem>>, %arg10: memref<8x128xf32, #tpu.memory_space<vmem>>) attributes {dimension_semantics = [#tpu.dimension_semantics<parallel>], iteration_bounds = array<i64: 1>, scalar_prefetch = 0 : i64, scratch_operands = 0 : i64, tpu.core_type = #tpu.core_type<tc>, window_params = [{transform_indices = @transform_0, window_bounds = array<i64: 8, 32>}, {pipeline_mode = #tpu.pipeline_mode<synchronous>, transform_indices = @transform_1, window_bounds = array<i64: 32, 128>}, {pipeline_mode = #tpu.pipeline_mode<synchronous>, transform_indices = @transform_2, window_bounds = array<i64: 1, 128>}, {pipeline_mode = #tpu.pipeline_mode<synchronous>, transform_indices = @transform_3, window_bounds = array<i64: 128, 128>}, {pipeline_mode = #tpu.pipeline_mode<synchronous>, transform_indices = @transform_4, window_bounds = array<i64: 1, 128>}, {pipeline_mode = #tpu.pipeline_mode<synchronous>, transform_indices = @transform_5, window_bounds = array<i64: 128, 128>}, {pipeline_mode = #tpu.pipeline_mode<synchronous>, transform_indices = @transform_6, window_bounds = array<i64: 1, 128>}, {pipeline_mode = #tpu.pipeline_mode<synchronous>, transform_indices = @transform_7, window_bounds = array<i64: 1, 128>}, {transform_indices = @transform_8, window_bounds = array<i64: 8, 128>}, {transform_indices = @transform_9, window_bounds = array<i64: 8, 128>}]} {
    %c0 = arith.constant 0 : index
    %c0_0 = arith.constant 0 : index
    %0 = vector.load %arg1[%c0, %c0_0] : memref<8x32xf32, #tpu.memory_space<vmem>>, vector<8x32xf32>
    %1 = arith.truncf %0 : vector<8x32xf32> to vector<8x32xbf16>
    %c0_1 = arith.constant 0 : index
    %c0_2 = arith.constant 0 : index
    %2 = vector.load %arg2[%c0_1, %c0_2] : memref<32x128xbf16, #tpu.memory_space<vmem>>, vector<32x128xbf16>
    %cst = arith.constant dense<0.000000e+00> : vector<8x128xf32>
    %3 = tpu.matmul %1, %2, %cst {dimension_numbers = #tpu.dot_dimension_numbers<[1], [0], [0], [1], [0, 0, 1, 1], [], []>} : vector<8x32xbf16>, vector<32x128xbf16>, vector<8x128xf32> -> vector<8x128xf32>
    %c0_3 = arith.constant 0 : index
    %c0_4 = arith.constant 0 : index
    %4 = vector.load %arg3[%c0_3, %c0_4] : memref<1x128xf32, #tpu.memory_space<vmem>>, vector<1x128xf32>
    %5 = vector.broadcast %4 : vector<1x128xf32> to vector<8x128xf32>
    %6 = arith.addf %3, %5 : vector<8x128xf32>
    %7 = math.tanh %6 : vector<8x128xf32>
    %8 = arith.truncf %7 : vector<8x128xf32> to vector<8x128xbf16>
    %c0_5 = arith.constant 0 : index
    %c0_6 = arith.constant 0 : index
    %9 = vector.load %arg4[%c0_5, %c0_6] : memref<128x128xbf16, #tpu.memory_space<vmem>>, vector<128x128xbf16>
    %cst_7 = arith.constant dense<0.000000e+00> : vector<8x128xf32>
    %10 = tpu.matmul %8, %9, %cst_7 {dimension_numbers = #tpu.dot_dimension_numbers<[1], [0], [0], [1], [0, 0, 1, 1], [], []>} : vector<8x128xbf16>, vector<128x128xbf16>, vector<8x128xf32> -> vector<8x128xf32>
    %c0_8 = arith.constant 0 : index
    %c0_9 = arith.constant 0 : index
    %11 = vector.load %arg5[%c0_8, %c0_9] : memref<1x128xf32, #tpu.memory_space<vmem>>, vector<1x128xf32>
    %12 = vector.broadcast %11 : vector<1x128xf32> to vector<8x128xf32>
    %13 = arith.addf %10, %12 : vector<8x128xf32>
    %14 = math.tanh %13 : vector<8x128xf32>
    %15 = arith.truncf %14 : vector<8x128xf32> to vector<8x128xbf16>
    %c0_10 = arith.constant 0 : index
    %c0_11 = arith.constant 0 : index
    %16 = vector.load %arg6[%c0_10, %c0_11] : memref<128x128xbf16, #tpu.memory_space<vmem>>, vector<128x128xbf16>
    %cst_12 = arith.constant dense<0.000000e+00> : vector<8x128xf32>
    %17 = tpu.matmul %15, %16, %cst_12 {dimension_numbers = #tpu.dot_dimension_numbers<[1], [0], [0], [1], [0, 0, 1, 1], [], []>} : vector<8x128xbf16>, vector<128x128xbf16>, vector<8x128xf32> -> vector<8x128xf32>
    %c0_13 = arith.constant 0 : index
    %c0_14 = arith.constant 0 : index
    %18 = vector.load %arg7[%c0_13, %c0_14] : memref<1x128xf32, #tpu.memory_space<vmem>>, vector<1x128xf32>
    %19 = vector.broadcast %18 : vector<1x128xf32> to vector<8x128xf32>
    %20 = arith.addf %17, %19 : vector<8x128xf32>
    %c0_15 = arith.constant 0 : index
    %c0_16 = arith.constant 0 : index
    %21 = vector.load %arg9[%c0_15, %c0_16] : memref<8x128xf32, #tpu.memory_space<vmem>>, vector<8x128xf32>
    tpu.vector_store %arg9[%c0_15, %c0_16], %20 {strides = array<i32>} : memref<8x128xf32, #tpu.memory_space<vmem>>, vector<8x128xf32>,
    %c0_17 = arith.constant 0 : index
    %c0_18 = arith.constant 0 : index
    %22 = vector.load %arg8[%c0_17, %c0_18] : memref<1x128xf32, #tpu.memory_space<vmem>>, vector<1x128xf32>
    %23 = vector.broadcast %22 : vector<1x128xf32> to vector<8x128xf32>
    %24 = arith.addf %20, %23 : vector<8x128xf32>
    %cst_19 = arith.constant dense<0xFF800000> : vector<8xf32>
    %25 = vector.multi_reduction <maximumf>, %24, %cst_19 [1] : vector<8x128xf32> to vector<8xf32>
    %26 = vector.shape_cast %25 : vector<8xf32> to vector<8x1xf32>
    %27 = vector.broadcast %26 : vector<8x1xf32> to vector<8x128xf32>
    %28 = arith.subf %24, %27 : vector<8x128xf32>
    %29 = math.exp %28 : vector<8x128xf32>
    %cst_20 = arith.constant dense<0.000000e+00> : vector<8xf32>
    %30 = vector.multi_reduction <add>, %29, %cst_20 [1] : vector<8x128xf32> to vector<8xf32>
    %31 = vector.shape_cast %30 : vector<8xf32> to vector<8x1xf32>
    %32 = vector.broadcast %31 : vector<8x1xf32> to vector<8x128xf32>
    %33 = arith.divf %29, %32 : vector<8x128xf32>
    %c0_21 = arith.constant 0 : index
    %c0_22 = arith.constant 0 : index
    %34 = vector.load %arg10[%c0_21, %c0_22] : memref<8x128xf32, #tpu.memory_space<vmem>>, vector<8x128xf32>
    tpu.vector_store %arg10[%c0_21, %c0_22], %33 {strides = array<i32>} : memref<8x128xf32, #tpu.memory_space<vmem>>, vector<8x128xf32>,
    return
  }
  func.func @transform_0(%arg0: i32) -> (i32, i32) {
    %c0_i32 = arith.constant 0 : i32
    %c0_i32_0 = arith.constant 0 : i32
    return %arg0, %c0_i32 : i32, i32
  }
  func.func @transform_1(%arg0: i32) -> (i32, i32) {
    %c0_i32 = arith.constant 0 : i32
    %c0_i32_0 = arith.constant 0 : i32
    %c0_i32_1 = arith.constant 0 : i32
    return %c0_i32, %c0_i32_0 : i32, i32
  }
  func.func @transform_2(%arg0: i32) -> (i32, i32) {
    %c0_i32 = arith.constant 0 : i32
    %c0_i32_0 = arith.constant 0 : i32
    %c0_i32_1 = arith.constant 0 : i32
    return %c0_i32, %c0_i32_0 : i32, i32
  }
  func.func @transform_3(%arg0: i32) -> (i32, i32) {
    %c0_i32 = arith.constant 0 : i32
    %c0_i32_0 = arith.constant 0 : i32
    %c0_i32_1 = arith.constant 0 : i32
    return %c0_i32, %c0_i32_0 : i32, i32
  }
  func.func @transform_4(%arg0: i32) -> (i32, i32) {
    %c0_i32 = arith.constant 0 : i32
    %c0_i32_0 = arith.constant 0 : i32
    %c0_i32_1 = arith.constant 0 : i32
    return %c0_i32, %c0_i32_0 : i32, i32
  }
  func.func @transform_5(%arg0: i32) -> (i32, i32) {
    %c0_i32 = arith.constant 0 : i32
    %c0_i32_0 = arith.constant 0 : i32
    %c0_i32_1 = arith.constant 0 : i32
    return %c0_i32, %c0_i32_0 : i32, i32
  }
  func.func @transform_6(%arg0: i32) -> (i32, i32) {
    %c0_i32 = arith.constant 0 : i32
    %c0_i32_0 = arith.constant 0 : i32
    %c0_i32_1 = arith.constant 0 : i32
    return %c0_i32, %c0_i32_0 : i32, i32
  }
  func.func @transform_7(%arg0: i32) -> (i32, i32) {
    %c0_i32 = arith.constant 0 : i32
    %c0_i32_0 = arith.constant 0 : i32
    %c0_i32_1 = arith.constant 0 : i32
    return %c0_i32, %c0_i32_0 : i32, i32
  }
  func.func @transform_8(%arg0: i32) -> (i32, i32) {
    %c0_i32 = arith.constant 0 : i32
    %c0_i32_0 = arith.constant 0 : i32
    return %arg0, %c0_i32 : i32, i32
  }
  func.func @transform_9(%arg0: i32) -> (i32, i32) {
    %c0_i32 = arith.constant 0 : i32
    %c0_i32_0 = arith.constant 0 : i32
    return %arg0, %c0_i32 : i32, i32
  }
}

</mosaic_0001>

<llo_original>
// kernel: base_model_forward.1
$region0: #{base_model_forward.1}
  #allocation0 [shape = 'u32[]', space=smem, size = 0x4, offset = 0x4, fixed_abs, tag = 'smem constant byte address 0x4 - core index']
  #allocation1 [shape = 'u32[72,128]{1,0:T(1,128)}', space=vmem, size = 0x9000, scoped, tag = 'internal scratch']
  %s0 = inlined_call_operand.hbm [shape: f32[8,32], index: 0, kind: input, shape index: {}]
  %s1 = inlined_call_operand.hbm [shape: bf16[32,128], index: 1, kind: input, shape index: {}]
  %s2 = inlined_call_operand.hbm [shape: f32[1,128], index: 2, kind: input, shape index: {}]
  %s3 = inlined_call_operand.hbm [shape: bf16[128,128], index: 3, kind: input, shape index: {}]
  %s4 = inlined_call_operand.vmem [shape: f32[1,128], index: 4, kind: input, shape index: {}]
  %s5 = inlined_call_operand.hbm [shape: bf16[128,128], index: 5, kind: input, shape index: {}]
  %s6 = inlined_call_operand.vmem [shape: f32[1,128], index: 6, kind: input, shape index: {}]
  %s7 = inlined_call_operand.vmem [shape: f32[1,128], index: 7, kind: input, shape index: {}]
  %s8 = inlined_call_operand.vmem [shape: f32[8,128], index: 8, kind: output, shape index: {0}]
  %s9 = inlined_call_operand.vmem [shape: f32[8,128], index: 9, kind: output, shape index: {1}]
  %10 = xla_tuple %s8, %s9
  %s11 = sld [smem:[#allocation0]]
  $region70: #{base_model_forward.1} parent=0
    _
  %s13 = ssub.s32 1, %s11
  %s14 = scalar_select 0, %s13, %s11
  $region1: #{base_model_forward.1} parent=0
    #allocation2 [shape = 'u8[4096]{0}', space=vmem, size = 0x1000, scoped, tag = 'input window, operand 0, single buffered']
    #allocation3 [shape = 's32[1]{0}', space=sflag, size = 0x4, scoped, tag = 'scoped memory for base_model_forward.1']
    #allocation4 [shape = 'u8[8192]{0}', space=vmem, size = 0x2000, scoped, tag = 'input window, operand 1, single buffered']
    #allocation5 [shape = 's32[1]{0}', space=sflag, size = 0x4, scoped, tag = 'scoped memory for base_model_forward.1']
    #allocation6 [shape = 'u8[512]{0}', space=vmem, size = 0x400, scoped, tag = 'input window, operand 2, single buffered']
    #allocation7 [shape = 'u8[32768]{0}', space=vmem, size = 0x8000, scoped, tag = 'input window, operand 3, single buffered']
    #allocation8 [shape = 's32[1]{0}', space=sflag, size = 0x4, scoped, tag = 'scoped memory for base_model_forward.1']
    #allocation9 [shape = 'u8[32768]{0}', space=vmem, size = 0x8000, scoped, tag = 'input window, operand 5, single buffered']
    %15 = vsyncpa [#allocation3], 0
    %16 = vsyncpa [#allocation5], 0
    %17 = vsyncpa [#allocation8], 0
    // Predicated region
    $region2: #{base_model_forward.1} parent=1 // pred_check
      _
    $region3: #{base_model_forward.1} parent=1 // pred_check_branch
      %19 = sbr.rel (0) target = $region5
    $region4: #{base_model_forward.1} parent=1 // pred_region
      %21 = vsyncadd [#allocation3], 0
      %s23 = sshll.u32 %s0, 4
      %s24 = int_to_ptr.hbm [resolvable:$true] %s23
      %s25 = sshll.u32 [#allocation2], 4
      %s26 = int_to_ptr.vmem [resolvable:$true] %s25
      %28 = dma.hbm_to_vmem [thread:$0]  %s24, 128, %s26, [#allocation3]
    $region5: #{base_model_forward.1} parent=1 // pred_fallthru
      _
    // Predicated region
    $region6: #{base_model_forward.1} parent=1 // pred_check
      _
    $region7: #{base_model_forward.1} parent=1 // pred_check_branch
      %30 = sbr.rel (0) target = $region9
    $region8: #{base_model_forward.1} parent=1 // pred_region
      %32 = vsyncadd [#allocation5], 0
      %s33 = sshll.u32 %s1, 4
      %s34 = int_to_ptr.hbm [resolvable:$true] %s33
      %s35 = sshll.u32 [#allocation4], 4
      %s36 = int_to_ptr.vmem [resolvable:$true] %s35
      %41 = dma.hbm_to_vmem [thread:$0]  %s34, 256, %s36, [#allocation5], 64, 64, 4
    $region9: #{base_model_forward.1} parent=1 // pred_fallthru
      _
    // Predicated region
    $region10: #{base_model_forward.1} parent=1 // pred_check
      _
    $region11: #{base_model_forward.1} parent=1 // pred_check_branch
      %43 = sbr.rel (0) target = $region13
    $region12: #{base_model_forward.1} parent=1 // pred_region
      %45 = vsyncadd [#allocation5], 0
      %s47 = sshll.u32 %s2, 4
      %s48 = int_to_ptr.hbm [resolvable:$true] %s47
      %s49 = sshll.u32 [#allocation6], 4
      %s50 = int_to_ptr.vmem [resolvable:$true] %s49
      %52 = dma.hbm_to_vmem [thread:$0]  %s48, 16, %s50, [#allocation5]
    $region13: #{base_model_forward.1} parent=1 // pred_fallthru
      _
    // Predicated region
    $region14: #{base_model_forward.1} parent=1 // pred_check
      _
    $region15: #{base_model_forward.1} parent=1 // pred_check_branch
      %54 = sbr.rel (0) target = $region17
    $region16: #{base_model_forward.1} parent=1 // pred_region
      %56 = vsyncadd [#allocation8], 0
      %s57 = sshll.u32 %s3, 4
      %s58 = int_to_ptr.hbm [resolvable:$true] %s57
      %s59 = sshll.u32 [#allocation7], 4
      %s60 = int_to_ptr.vmem [resolvable:$true] %s59
      %65 = dma.hbm_to_vmem [thread:$0]  %s58, 1024, %s60, [#allocation8], 64, 64, 4
    $region17: #{base_model_forward.1} parent=1 // pred_fallthru
      _
    // Predicated region
    $region18: #{base_model_forward.1} parent=1 // pred_check
      _
    $region19: #{base_model_forward.1} parent=1 // pred_check_branch
      %67 = sbr.rel (0) target = $region21
    $region20: #{base_model_forward.1} parent=1 // pred_region
      _
    $region21: #{base_model_forward.1} parent=1 // pred_fallthru
      _
    // Predicated region
    $region22: #{base_model_forward.1} parent=1 // pred_check
      _
    $region23: #{base_model_forward.1} parent=1 // pred_check_branch
      %69 = sbr.rel (0) target = $region25
    $region24: #{base_model_forward.1} parent=1 // pred_region
      %71 = vsyncadd [#allocation8], 0
      %s72 = sshll.u32 %s5, 4
      %s73 = int_to_ptr.hbm [resolvable:$true] %s72
      %s74 = sshll.u32 [#allocation9], 4
      %s75 = int_to_ptr.vmem [resolvable:$true] %s74
      %80 = dma.hbm_to_vmem [thread:$0]  %s73, 1024, %s75, [#allocation8], 64, 64, 4
    $region25: #{base_model_forward.1} parent=1 // pred_fallthru
      _
    // Predicated region
    $region26: #{base_model_forward.1} parent=1 // pred_check
      _
    $region27: #{base_model_forward.1} parent=1 // pred_check_branch
      %82 = sbr.rel (0) target = $region29
    $region28: #{base_model_forward.1} parent=1 // pred_region
      _
    $region29: #{base_model_forward.1} parent=1 // pred_fallthru
      _
    // Predicated region
    $region30: #{base_model_forward.1} parent=1 // pred_check
      _
    $region31: #{base_model_forward.1} parent=1 // pred_check_branch
      %84 = sbr.rel (0) target = $region33
    $region32: #{base_model_forward.1} parent=1 // pred_region
      _
    $region33: #{base_model_forward.1} parent=1 // pred_fallthru
      _
    // Predicated region
    $region34: #{base_model_forward.1} parent=1 // pred_check
      _
    $region35: #{base_model_forward.1} parent=1 // pred_check_branch
      %86 = sbr.rel (0) target = $region37
    $region36: #{base_model_forward.1} parent=1 // pred_region
      %88 = dma.done [#allocation3], 128
    $region37: #{base_model_forward.1} parent=1 // pred_fallthru
      _
    // Predicated region
    $region38: #{base_model_forward.1} parent=1 // pred_check
      _
    $region39: #{base_model_forward.1} parent=1 // pred_check_branch
      %90 = sbr.rel (0) target = $region41
    $region40: #{base_model_forward.1} parent=1 // pred_region
      %92 = dma.done [#allocation5], 256
    $region41: #{base_model_forward.1} parent=1 // pred_fallthru
      _
    // Predicated region
    $region42: #{base_model_forward.1} parent=1 // pred_check
      _
    $region43: #{base_model_forward.1} parent=1 // pred_check_branch
      %94 = sbr.rel (0) target = $region45
    $region44: #{base_model_forward.1} parent=1 // pred_region
      %96 = dma.done [#allocation5], 16
    $region45: #{base_model_forward.1} parent=1 // pred_fallthru
      _
    // Predicated region
    $region46: #{base_model_forward.1} parent=1 // pred_check
      _
    $region47: #{base_model_forward.1} parent=1 // pred_check_branch
      %98 = sbr.rel (0) target = $region49
    $region48: #{base_model_forward.1} parent=1 // pred_region
      %100 = dma.done [#allocation8], 1024
    $region49: #{base_model_forward.1} parent=1 // pred_fallthru
      _
    // Predicated region
    $region50: #{base_model_forward.1} parent=1 // pred_check
      _
    $region51: #{base_model_forward.1} parent=1 // pred_check_branch
      %102 = sbr.rel (0) target = $region53
    $region52: #{base_model_forward.1} parent=1 // pred_region
      %104 = dma.done [#allocation8], 1024
    $region53: #{base_model_forward.1} parent=1 // pred_fallthru
      _
    %v106 = vld [vmem:[#allocation2] sm:$0xff]
    %v107 = vpack.c.bf16 %v106, %v106
    %v108 = vld [vmem:[#allocation4] sm:$0xf]
    %v109 = vld [vmem:[#allocation4 + $0x4] sm:$0xf]
    %v110 = vld [vmem:[#allocation4 + $0x8] sm:$0xf]
    %v111 = vld [vmem:[#allocation4 + $0xc] sm:$0xf]
    %v112 = vld [vmem:[#allocation6] sm:$0x1]
    %v114 = vperm.slane %v112, 0
    %v120 = vunpack.c.l.b16 %v108
    %v121 = vunpack.c.l.b16 %v109
    %v122 = vunpack.c.l.b16 %v110
    %v123 = vunpack.c.l.b16 %v111
    %v124 = vpack.c.b16 %v121, %v120
    %v125 = vpack.c.b16 %v123, %v122
    %vm128 = vcmask 261120
    %v130 = vsel %vm128, %v107, 0
    %132 = vmatpush.bf16.msra.mxu0 0
    %133 = vmatpush.bf16.msra.mxu0 0
    %134 = vmatpush.bf16.msra.mxu0 0
    %135 = vmatpush.bf16.msra.mxu0 0
    %136 = vmatpush.bf16.msra.mxu0 0
    %137 = vmatpush.bf16.msra.mxu0 0
    %138 = vmatpush.bf16.msra.mxu0 %v125
    %139 = vmatpush.bf16.msra.mxu0 %v124
    %140 = vmatmul.bf16.gmra.mxu0 %v130
    %v141 = vpop.f32.mrf.mxu0
    %v142 = vadd.f32 %v114, %v141
    %v143 = vpop.f32.mrf.mxu0
    %144 = vdwg.mxu0
    %v145 = vtanh.pop %v142
    %v146 = vpack.c.bf16 %v145, %v145
    %v147 = vld [vmem:[#allocation7] sm:$0xf]
    %v148 = vld [vmem:[#allocation7 + $0x4] sm:$0xf]
    %v149 = vld [vmem:[#allocation7 + $0x8] sm:$0xf]
    %v150 = vld [vmem:[#allocation7 + $0xc] sm:$0xf]
    %v151 = vld [vmem:[#allocation7 + $0x10] sm:$0xf]
    %v152 = vld [vmem:[#allocation7 + $0x14] sm:$0xf]
    %v153 = vld [vmem:[#allocation7 + $0x18] sm:$0xf]
    %v154 = vld [vmem:[#allocation7 + $0x1c] sm:$0xf]
    %v155 = vld [vmem:[#allocation7 + $0x20] sm:$0xf]
    %v156 = vld [vmem:[#allocation7 + $0x24] sm:$0xf]
    %v157 = vld [vmem:[#allocation7 + $0x28] sm:$0xf]
    %v158 = vld [vmem:[#allocation7 + $0x2c] sm:$0xf]
    %v159 = vld [vmem:[#allocation7 + $0x30] sm:$0xf]
    %v160 = vld [vmem:[#allocation7 + $0x34] sm:$0xf]
    %v161 = vld [vmem:[#allocation7 + $0x38] sm:$0xf]
    %v162 = vld [vmem:[#allocation7 + $0x3c] sm:$0xf]
    %v163 = vld [vmem:[%s4] sm:$0x1]
    %v165 = vperm.slane %v163, 0
    %v183 = vunpack.c.l.b16 %v147
    %v184 = vunpack.c.l.b16 %v148
    %v185 = vunpack.c.l.b16 %v149
    %v186 = vunpack.c.l.b16 %v150
    %v187 = vunpack.c.l.b16 %v151
    %v188 = vunpack.c.l.b16 %v152
    %v189 = vunpack.c.l.b16 %v153
    %v190 = vunpack.c.l.b16 %v154
    %v191 = vunpack.c.l.b16 %v155
    %v192 = vunpack.c.l.b16 %v156
    %v193 = vunpack.c.l.b16 %v157
    %v194 = vunpack.c.l.b16 %v158
    %v195 = vunpack.c.l.b16 %v159
    %v196 = vunpack.c.l.b16 %v160
    %v197 = vunpack.c.l.b16 %v161
    %v198 = vunpack.c.l.b16 %v162
    %v199 = vpack.c.b16 %v184, %v183
    %v200 = vpack.c.b16 %v186, %v185
    %v201 = vpack.c.b16 %v188, %v187
    %v202 = vpack.c.b16 %v190, %v189
    %v203 = vpack.c.b16 %v192, %v191
    %v204 = vpack.c.b16 %v194, %v193
    %v205 = vpack.c.b16 %v196, %v195
    %v206 = vpack.c.b16 %v198, %v197
    %215 = vmatpush.bf16.msra.mxu0 %v206
    %216 = vmatpush.bf16.msra.mxu0 %v205
    %217 = vmatpush.bf16.msra.mxu0 %v204
    %218 = vmatpush.bf16.msra.mxu0 %v203
    %219 = vmatpush.bf16.msra.mxu0 %v202
    %220 = vmatpush.bf16.msra.mxu0 %v201
    %221 = vmatpush.bf16.msra.mxu0 %v200
    %222 = vmatpush.bf16.msra.mxu0 %v199
    %223 = vmatmul.bf16.gmra.mxu0 %v146
    %v224 = vpop.f32.mrf.mxu0
    %v225 = vadd.f32 %v165, %v224
    %v226 = vpop.f32.mrf.mxu0
    %227 = vdwg.mxu0
    %v228 = vtanh.pop %v225
    %v229 = vpack.c.bf16 %v228, %v228
    %v230 = vld [vmem:[#allocation9] sm:$0xf]
    %v231 = vld [vmem:[#allocation9 + $0x4] sm:$0xf]
    %v232 = vld [vmem:[#allocation9 + $0x8] sm:$0xf]
    %v233 = vld [vmem:[#allocation9 + $0xc] sm:$0xf]
    %v234 = vld [vmem:[#allocation9 + $0x10] sm:$0xf]
    %v235 = vld [vmem:[#allocation9 + $0x14] sm:$0xf]
    %v236 = vld [vmem:[#allocation9 + $0x18] sm:$0xf]
    %v237 = vld [vmem:[#allocation9 + $0x1c] sm:$0xf]
    %v238 = vld [vmem:[#allocation9 + $0x20] sm:$0xf]
    %v239 = vld [vmem:[#allocation9 + $0x24] sm:$0xf]
    %v240 = vld [vmem:[#allocation9 + $0x28] sm:$0xf]
    %v241 = vld [vmem:[#allocation9 + $0x2c] sm:$0xf]
    %v242 = vld [vmem:[#allocation9 + $0x30] sm:$0xf]
    %v243 = vld [vmem:[#allocation9 + $0x34] sm:$0xf]
    %v244 = vld [vmem:[#allocation9 + $0x38] sm:$0xf]
    %v245 = vld [vmem:[#allocation9 + $0x3c] sm:$0xf]
    %v246 = vld [vmem:[%s6] sm:$0x1]
    %v248 = vperm.slane %v246, 0
    %v266 = vunpack.c.l.b16 %v230
    %v267 = vunpack.c.l.b16 %v231
    %v268 = vunpack.c.l.b16 %v232
    %v269 = vunpack.c.l.b16 %v233
    %v270 = vunpack.c.l.b16 %v234
    %v271 = vunpack.c.l.b16 %v235
    %v272 = vunpack.c.l.b16 %v236
    %v273 = vunpack.c.l.b16 %v237
    %v274 = vunpack.c.l.b16 %v238
    %v275 = vunpack.c.l.b16 %v239
    %v276 = vunpack.c.l.b16 %v240
    %v277 = vunpack.c.l.b16 %v241
    %v278 = vunpack.c.l.b16 %v242
    %v279 = vunpack.c.l.b16 %v243
    %v280 = vunpack.c.l.b16 %v244
    %v281 = vunpack.c.l.b16 %v245
    %v282 = vpack.c.b16 %v267, %v266
    %v283 = vpack.c.b16 %v269, %v268
    %v284 = vpack.c.b16 %v271, %v270
    %v285 = vpack.c.b16 %v273, %v272
    %v286 = vpack.c.b16 %v275, %v274
    %v287 = vpack.c.b16 %v277, %v276
    %v288 = vpack.c.b16 %v279, %v278
    %v289 = vpack.c.b16 %v281, %v280
    %298 = vmatpush.bf16.msra.mxu0 %v289
    %299 = vmatpush.bf16.msra.mxu0 %v288
    %300 = vmatpush.bf16.msra.mxu0 %v287
    %301 = vmatpush.bf16.msra.mxu0 %v286
    %302 = vmatpush.bf16.msra.mxu0 %v285
    %303 = vmatpush.bf16.msra.mxu0 %v284
    %304 = vmatpush.bf16.msra.mxu0 %v283
    %305 = vmatpush.bf16.msra.mxu0 %v282
    %306 = vmatmul.bf16.gmra.mxu0 %v229
    %v307 = vpop.f32.mrf.mxu0
    %v308 = vadd.f32 %v248, %v307
    %v309 = vpop.f32.mrf.mxu0
    %310 = vdwg.mxu0
    %311 = vst [vmem:[%s8] sm:$0xff] %v308
    %v312 = vld [vmem:[%s7] sm:$0x1]
    %v314 = vperm.slane %v312, 0
    %v316 = vadd.f32 %v308, %v314
    %317 = vmax.xlane.f32.xlu0 %v316
    %v318 = vpop.xlane.xlu0 %317
    %v319 = vsub.f32 %v316, %v318
    %v320 = vmul.f32 %v319, 1.442695
    %v321 = vpow.pop %v320
    %322 = vadd.xlane.f32.xlu0 %v321
    %v323 = vpop.xlane.xlu0 %322
    %v324 = vrcp.pop %v323
    %v325 = vmul.f32 %v323, %v324
    %v326 = vsub.f32 1.0, %v325
    %v327 = vmul.f32 %v324, %v326
    %v328 = vadd.f32 %v324, %v327
    %vm329 = vweird.f32 %v323
    %vm330 = vweird.f32 %v324
    %vm331 = vmor %vm329, %vm330
    %v332 = vsel %vm331, %v324, %v328
    %v333 = vand.u32 2147483647, %v323
    %vm334 = vcmp.eq.f32.partialorder %v333, 8.507059e+37
    %v335 = vand.u32 %v323, 2147483648
    %v336 = vor.u32 1.1754944e-38, %v335
    %v337 = vsel %vm334, %v336, %v332
    %v338 = vmul.f32 %v321, %v337
    %339 = vst [vmem:[%s9] sm:$0xff] %v338
    // Predicated region
    $region54: #{base_model_forward.1} parent=1 // pred_check
      _
    $region55: #{base_model_forward.1} parent=1 // pred_check_branch
      %341 = sbr.rel (0) target = $region57
    $region56: #{base_model_forward.1} parent=1 // pred_region
      _
    $region57: #{base_model_forward.1} parent=1 // pred_fallthru
      _
    // Predicated region
    $region58: #{base_model_forward.1} parent=1 // pred_check
      _
    $region59: #{base_model_forward.1} parent=1 // pred_check_branch
      %343 = sbr.rel (0) target = $region61
    $region60: #{base_model_forward.1} parent=1 // pred_region
      _
    $region61: #{base_model_forward.1} parent=1 // pred_fallthru
      _
    // Predicated region
    $region62: #{base_model_forward.1} parent=1 // pred_check
      _
    $region63: #{base_model_forward.1} parent=1 // pred_check_branch
      %345 = sbr.rel (0) target = $region65
    $region64: #{base_model_forward.1} parent=1 // pred_region
      _
    $region65: #{base_model_forward.1} parent=1 // pred_fallthru
      _
    // Predicated region
    $region66: #{base_model_forward.1} parent=1 // pred_check
      _
    $region67: #{base_model_forward.1} parent=1 // pred_check_branch
      %347 = sbr.rel (0) target = $region69
    $region68: #{base_model_forward.1} parent=1 // pred_region
      _
    $region69: #{base_model_forward.1} parent=1 // pred_fallthru
      _
    %348 = vsyncpa [#allocation3], 1
    %349 = vsyncpa [#allocation5], 1
    %350 = vsyncpa [#allocation8], 1

</llo_original>
